<compile_context>
chip_gen: v5e
topology: v5e:2x2
jax: 0.10.0
libtpu: 0.0.40
codegen_flags: <defaults>
</compile_context>

<pallas_src>
import functools

import jax
import jax.numpy as jnp
import numpy as np
from jax.experimental import pallas as pl
from jax.experimental.pallas import tpu as pltpu


# ----------------------------------------------------------------------------
# Kernel
# ----------------------------------------------------------------------------
def _bn_relu_conv3x3_kernel(x_body_ref, x_halo_ref, scale_ref, shift_ref,
                            w_ref, b_ref, o_ref):
    """One (tile_h, W) output tile of conv3x3(relu(bn(x))) + bias, stored NCHW.

    x_body_ref : (tile_h, W+2, Cin)  padded-input rows [j*th, (j+1)*th)
    x_halo_ref : (2, W+2, Cin)       padded-input rows [(j+1)*th, (j+1)*th+2)
    scale_ref  : (1, Cin)    gamma / sqrt(var + eps)
    shift_ref  : (1, Cin)    beta - mean * scale
    w_ref      : (9*Cin, Cout)  im2col weights, row index = (dy*3 + dx)*Cin + c
    b_ref      : (1, Cout)   conv bias
    o_ref      : (Cout, tile_h*W)  NCHW output tile (lane-dense last dim)
    """
    th, wp2, cin = x_body_ref.shape
    w = wp2 - 2
    h_total = pl.num_programs(1) * th            # unpadded image height

    # (tile_h+2, W+2, Cin) halo window assembled on-chip.  Axis 0 is the outer
    # (non-sublane/lane) dim, so this concat is just vreg stacking.
    x = jnp.concatenate([x_body_ref[...], x_halo_ref[...]], axis=0)

    # Folded BatchNorm + ReLU (f32 on the VPU).  scale/shift blocks have a
    # constant index_map so they are not re-DMA'd every grid step.
    a = jnp.maximum(x * scale_ref[...] + shift_ref[...], 0.0)

    # The conv's zero padding applies to relu(bn(x)).  The padded entries of x
    # hold raw zeros, but relu(0*scale + shift) != 0 in general, so mask those
    # spatial positions back to zero (2 iotas + compares + 1 select; VPU-cheap).
    row = (jax.lax.broadcasted_iota(jnp.int32, (th + 2, wp2, 1), 0)
           + pl.program_id(1) * th)              # global padded row index
    col = jax.lax.broadcasted_iota(jnp.int32, (th + 2, wp2, 1), 1)
    interior = (row >= 1) & (row <= h_total) & (col >= 1) & (col <= w)
    a = jnp.where(interior, a, 0.0).astype(w_ref.dtype)

    # im2col-lite: 3 sublane-shifted column slices first, then 3 cheap outer
    # row slices, concatenated along the channel (lane) axis, so the whole 3x3
    # conv is ONE (tile_h*W, 9*Cin) x (9*Cin, Cout) MXU matmul (f32 accum).
    ax = jnp.concatenate([a[:, dx:dx + w, :] for dx in range(3)], axis=-1)
    patches = jnp.concatenate([ax[dy:dy + th] for dy in range(3)], axis=-1)
    patches = patches.reshape(th * w, 9 * cin)

    acc = jnp.dot(patches, w_ref[...], preferred_element_type=jnp.float32)
    out = acc + b_ref[...]                       # (th*w, Cout) + (1, Cout)

    # Fused NHWC->NCHW: transpose the small result tile on-chip so the store
    # is a lane-dense (Cout, tile_h*W) NCHW block and no XLA transpose pass
    # over the output is needed afterwards.
    o_ref[...] = out.T.astype(o_ref.dtype)


# ----------------------------------------------------------------------------
# Tiling helpers
# ----------------------------------------------------------------------------
def _vmem_bytes_estimate(tile_h, w, cin, cout, mm_itemsize):
    """Rough per-step VMEM need: 2x-buffered blocks + in-kernel temporaries."""
    in_body = tile_h * (w + 2) * cin * 4
    in_halo = 2 * (w + 2) * cin * 4
    out_b = cout * tile_h * w * 4
    w_b = 9 * cin * cout * mm_itemsize
    small = (2 * cin + 2 * cout) * 4
    window = (tile_h + 2) * (w + 2) * cin * 4            # concat window (f32)
    act = (tile_h + 2) * (w + 2) * cin * mm_itemsize     # masked activations
    dxcat = (tile_h + 2) * w * 3 * cin * mm_itemsize     # column-shift concat
    patches = tile_h * w * 9 * cin * mm_itemsize         # im2col temporary
    acc = tile_h * w * cout * 4                          # matmul accumulator
    out_t = cout * tile_h * w * 4                        # transposed result
    return (2 * (in_body + in_halo + out_b + w_b + small)
            + window + act + dxcat + patches + acc + out_t)


def _tile_h_ok(th, h, w):
    """Constraints: divides H, even (2-row halo block alignment), and the NCHW
    output block's last dim (th*W) is lane-aligned (or the full H*W)."""
    return (h % th == 0) and (th % 2 == 0) and ((th * w) % 128 == 0 or th == h)


def _choose_tile_h(h, w, cin, cout, mm_itemsize,
                   budget_bytes=12 << 20, max_tile_h=512):
    """Largest valid tile_h whose working set fits the VMEM budget.

    Budget defaults to 12 MiB so the kernel fits the smallest scoped-VMEM
    default across generations (v5e: 16 MiB) and leaves headroom for v7x's
    64 MiB *physical* VMEM with 2-deep buffering.
    """
    for th in range(min(h, max_tile_h), 0, -1):
        if not _tile_h_ok(th, h, w):
            continue
        if _vmem_bytes_estimate(th, w, cin, cout, mm_itemsize) <= budget_bytes:
            return th
    # TODO(synk): fall back to a non-fused-output / gather-based path for odd
    # H or pathologically misaligned shapes.
    raise ValueError(f"no valid tile_h for H={h}, W={w}")


# ----------------------------------------------------------------------------
# pallas_call wrapper
# ----------------------------------------------------------------------------
def _conv_block_pallas(x_pad, scale2, shift2, w2, b2, *, tile_h, grid,
                       vmem_limit_bytes, out_dtype=jnp.float32):
    n, n_h = grid
    _, hp2, wp2, cin = x_pad.shape
    w_img = wp2 - 2
    cout = w2.shape[-1]
    half = tile_h // 2

    # Two views of the SAME padded array deliver the overlapping halo window:
    # "body" = rows [j*th, (j+1)*th), "halo" = rows [(j+1)*th, (j+1)*th + 2).
    body_spec = pl.BlockSpec((None, tile_h, wp2, cin),
                             lambda i, j: (i, j, 0, 0))
    halo_spec = pl.BlockSpec((None, 2, wp2, cin),
                             lambda i, j: (i, (j + 1) * half, 0, 0))

    def const2(i, j):
        return (0, 0)

    return pl.pallas_call(
        _bn_relu_conv3x3_kernel,
        out_shape=jax.ShapeDtypeStruct((n, cout, n_h * tile_h * w_img),
                                       out_dtype),
        grid_spec=pltpu.PrefetchScalarGridSpec(
            num_scalar_prefetch=0,
            grid=grid,
            in_specs=[
                body_spec,
                halo_spec,
                pl.BlockSpec((1, cin), const2),
                pl.BlockSpec((1, cin), const2),
                pl.BlockSpec((9 * cin, cout), const2),
                pl.BlockSpec((1, cout), const2),
            ],
            out_specs=pl.BlockSpec((None, cout, tile_h * w_img),
                                   lambda i, j: (i, 0, j)),
        ),
        compiler_params=pltpu.CompilerParams(
            dimension_semantics=("parallel", "parallel"),
            vmem_limit_bytes=vmem_limit_bytes),
    )(x_pad, x_pad, scale2, shift2, w2, b2)


# ----------------------------------------------------------------------------
# Full forward (NCHW in / NCHW out, matching the PyTorch module)
# ----------------------------------------------------------------------------
def convolutional_block_forward(x_nchw, conv_w, conv_b, bn_gamma, bn_beta,
                                eps=1e-5, *, tile_h=None,
                                matmul_dtype=jnp.float32):
    x = x_nchw.astype(jnp.float32)
    N, Cin, H, W = x.shape
    Cout = conv_w.shape[0]

    # BatchNorm2d batch statistics (biased variance), folded into per-channel
    # scale/shift.  One pass (mean + mean-of-squares) => a single sweep over x.
    m = jnp.mean(x, axis=(0, 2, 3))
    m2 = jnp.mean(jnp.square(x), axis=(0, 2, 3))
    var = m2 - jnp.square(m)
    scale = bn_gamma * jax.lax.rsqrt(var + eps)
    shift = bn_beta - m * scale

    mm_itemsize = jnp.dtype(matmul_dtype).itemsize
    if tile_h is None:
        tile_h = _choose_tile_h(H, W, Cin, Cout, mm_itemsize)
    if not _tile_h_ok(tile_h, H, W):
        raise ValueError(f"tile_h={tile_h} invalid for H={H}, W={W}")
    n_h = H // tile_h

    # TODO(synk): if the surrounding model can stay NHWC, drop this transpose
    # too (XLA fuses it with the pad into one pass, but it still costs one
    # read+write of x for a memory-bound op).
    x_pad = jnp.pad(jnp.transpose(x, (0, 2, 3, 1)),
                    ((0, 0), (1, 1), (1, 1), (0, 0)))

    # Conv weights (Cout, Cin, 3, 3) -> im2col layout (9*Cin, Cout); MXU
    # operands in `matmul_dtype` (bf16 on v6e/v7x), accumulation stays f32.
    w2 = jnp.transpose(conv_w, (2, 3, 1, 0)).reshape(9 * Cin, Cout)
    w2 = w2.astype(matmul_dtype)

    scale2 = scale.reshape(1, Cin).astype(jnp.float32)
    shift2 = shift.reshape(1, Cin).astype(jnp.float32)
    b2 = conv_b.reshape(1, Cout).astype(jnp.float32)

    est = _vmem_bytes_estimate(tile_h, W, Cin, Cout, mm_itemsize)
    vmem_limit = int(min(48 << 20, max(16 << 20, 2 * est)))

    out = _conv_block_pallas(x_pad, scale2, shift2, w2, b2,
                             tile_h=tile_h, grid=(N, n_h),
                             vmem_limit_bytes=vmem_limit)
    # The kernel already wrote NCHW row-major data; this reshape is free.
    return out.reshape(N, Cout, H, W)


# ----------------------------------------------------------------------------
# Pure-JAX reference (same semantics) for correctness checking
# ----------------------------------------------------------------------------
def _reference_forward(x_nchw, conv_w, conv_b, bn_gamma, bn_beta, eps=1e-5):
    x = x_nchw.astype(jnp.float32)
    mean = jnp.mean(x, axis=(0, 2, 3), keepdims=True)
    var = jnp.mean((x - mean) ** 2, axis=(0, 2, 3), keepdims=True)
    xn = (x - mean) / jnp.sqrt(var + eps)
    a = jax.nn.relu(xn * bn_gamma[None, :, None, None]
                    + bn_beta[None, :, None, None])
    out = jax.lax.conv_general_dilated(
        a, conv_w, window_strides=(1, 1), padding=((1, 1), (1, 1)),
        dimension_numbers=("NCHW", "OIHW", "NCHW"))
    return out + conv_b[None, :, None, None]


if __name__ == "__main__":
    # Small shapes consistent with the module.
    N, Cin, Cout, H, W = 2, 4, 8, 16, 16

    key = jax.random.PRNGKey(0)
    kx, kw, kb = jax.random.split(key, 3)

    x = jax.random.normal(kx, (N, Cin, H, W), dtype=jnp.float32)

    # Deterministic Kaiming-style init for the conv (fan_in = Cin*3*3).
    fan_in = Cin * 3 * 3
    std = float(np.sqrt(2.0 / fan_in))
    conv_w = std * jax.random.normal(kw, (Cout, Cin, 3, 3), dtype=jnp.float32)
    conv_b = 0.01 * jax.random.normal(kb, (Cout,), dtype=jnp.float32)

    # BatchNorm2d default parameter init.
    bn_gamma = jnp.ones((Cin,), jnp.float32)
    bn_beta = jnp.zeros((Cin,), jnp.float32)

    ref = _reference_forward(x, conv_w, conv_b, bn_gamma, bn_beta)

    # f32 MXU-operand path with explicit H tiling (tile_h=8 -> grid (2, 2)).
    fwd_f32 = jax.jit(functools.partial(
        convolutional_block_forward, conv_w=conv_w, conv_b=conv_b,
        bn_gamma=bn_gamma, bn_beta=bn_beta, tile_h=8,
        matmul_dtype=jnp.float32))
    out_f32 = jax.block_until_ready(fwd_f32(x))
    np.testing.assert_allclose(np.asarray(out_f32), np.asarray(ref),
                               rtol=2e-4, atol=2e-4)

    # bf16 MXU-operand path (f32 accumulation), auto tile choice (tile_h=16).
    fwd_bf16 = jax.jit(functools.partial(
        convolutional_block_forward, conv_w=conv_w, conv_b=conv_b,
        bn_gamma=bn_gamma, bn_beta=bn_beta,
        matmul_dtype=jnp.bfloat16))
    out_bf16 = jax.block_until_ready(fwd_bf16(x))
    np.testing.assert_allclose(np.asarray(out_bf16), np.asarray(ref),
                               rtol=3e-2, atol=3e-2)

    print("KERNEL_OK")
</pallas_src>

<mosaic_0001>
module attributes {stable_mosaic.version = 11 : i64} {
  func.func @_bn_relu_conv3x3_kernel(%arg0: i32, %arg1: i32, %arg2: memref<1x8x18x4xf32, #tpu.memory_space<vmem>>, %arg3: memref<1x2x18x4xf32, #tpu.memory_space<vmem>>, %arg4: memref<1x4xf32, #tpu.memory_space<vmem>>, %arg5: memref<1x4xf32, #tpu.memory_space<vmem>>, %arg6: memref<36x8xf32, #tpu.memory_space<vmem>>, %arg7: memref<1x8xf32, #tpu.memory_space<vmem>>, %arg8: memref<1x8x128xf32, #tpu.memory_space<vmem>>) attributes {dimension_semantics = [#tpu.dimension_semantics<parallel>, #tpu.dimension_semantics<parallel>], iteration_bounds = array<i64: 2, 2>, scalar_prefetch = 0 : i64, scratch_operands = 0 : i64, tpu.core_type = #tpu.core_type<tc>, window_params = [{transform_indices = @transform_0, window_bounds = array<i64: 1, 8, 18, 4>}, {transform_indices = @transform_1, window_bounds = array<i64: 1, 2, 18, 4>}, {pipeline_mode = #tpu.pipeline_mode<synchronous>, transform_indices = @transform_2, window_bounds = array<i64: 1, 4>}, {pipeline_mode = #tpu.pipeline_mode<synchronous>, transform_indices = @transform_3, window_bounds = array<i64: 1, 4>}, {pipeline_mode = #tpu.pipeline_mode<synchronous>, transform_indices = @transform_4, window_bounds = array<i64: 36, 8>}, {pipeline_mode = #tpu.pipeline_mode<synchronous>, transform_indices = @transform_5, window_bounds = array<i64: 1, 8>}, {transform_indices = @transform_6, window_bounds = array<i64: 1, 8, 128>}]} {
    %c0 = arith.constant 0 : index
    %c0_0 = arith.constant 0 : index
    %c0_1 = arith.constant 0 : index
    %c0_2 = arith.constant 0 : index
    %0 = vector.load %arg2[%c0, %c0_0, %c0_1, %c0_2] : memref<1x8x18x4xf32, #tpu.memory_space<vmem>>, vector<1x8x18x4xf32>
    %1 = vector.shape_cast %0 : vector<1x8x18x4xf32> to vector<8x18x4xf32>
    %c0_3 = arith.constant 0 : index
    %c0_4 = arith.constant 0 : index
    %c0_5 = arith.constant 0 : index
    %c0_6 = arith.constant 0 : index
    %2 = vector.load %arg3[%c0_3, %c0_4, %c0_5, %c0_6] : memref<1x2x18x4xf32, #tpu.memory_space<vmem>>, vector<1x2x18x4xf32>
    %3 = vector.shape_cast %2 : vector<1x2x18x4xf32> to vector<2x18x4xf32>
    %4 = tpu.concatenate %1, %3 in 0 : vector<8x18x4xf32>, vector<2x18x4xf32> -> vector<10x18x4xf32>
    %c0_7 = arith.constant 0 : index
    %c0_8 = arith.constant 0 : index
    %5 = vector.load %arg4[%c0_7, %c0_8] : memref<1x4xf32, #tpu.memory_space<vmem>>, vector<1x4xf32>
    %6 = vector.shape_cast %5 : vector<1x4xf32> to vector<1x1x4xf32>
    %7 = vector.broadcast %6 : vector<1x1x4xf32> to vector<10x18x4xf32>
    %8 = arith.mulf %4, %7 : vector<10x18x4xf32>
    %c0_9 = arith.constant 0 : index
    %c0_10 = arith.constant 0 : index
    %9 = vector.load %arg5[%c0_9, %c0_10] : memref<1x4xf32, #tpu.memory_space<vmem>>, vector<1x4xf32>
    %10 = vector.shape_cast %9 : vector<1x4xf32> to vector<1x1x4xf32>
    %11 = vector.broadcast %10 : vector<1x1x4xf32> to vector<10x18x4xf32>
    %12 = arith.addf %8, %11 : vector<10x18x4xf32>
    %cst = arith.constant 0.000000e+00 : f32
    %13 = vector.broadcast %cst : f32 to vector<10x18x4xf32>
    %14 = arith.maximumf %12, %13 : vector<10x18x4xf32>
    %15 = tpu.iota {dimensions = array<i32: 0>} : vector<10x18x1xi32>
    %c8_i32 = arith.constant 8 : i32
    %16 = arith.muli %arg1, %c8_i32 : i32
    %17 = vector.broadcast %16 : i32 to vector<10x18x1xi32>
    %18 = arith.addi %15, %17 : vector<10x18x1xi32>
    %19 = tpu.iota {dimensions = array<i32: 1>} : vector<10x18x1xi32>
    %c1_i32 = arith.constant 1 : i32
    %20 = vector.broadcast %c1_i32 : i32 to vector<10x18x1xi32>
    %21 = arith.cmpi sge, %18, %20 : vector<10x18x1xi32>
    %c16_i32 = arith.constant 16 : i32
    %22 = vector.broadcast %c16_i32 : i32 to vector<10x18x1xi32>
    %23 = arith.cmpi sle, %18, %22 : vector<10x18x1xi32>
    %24 = arith.andi %21, %23 : vector<10x18x1xi1>
    %c1_i32_11 = arith.constant 1 : i32
    %25 = vector.broadcast %c1_i32_11 : i32 to vector<10x18x1xi32>
    %26 = arith.cmpi sge, %19, %25 : vector<10x18x1xi32>
    %27 = arith.andi %24, %26 : vector<10x18x1xi1>
    %c16_i32_12 = arith.constant 16 : i32
    %28 = vector.broadcast %c16_i32_12 : i32 to vector<10x18x1xi32>
    %29 = arith.cmpi sle, %19, %28 : vector<10x18x1xi32>
    %30 = arith.andi %27, %29 : vector<10x18x1xi1>
    %cst_13 = arith.constant 0.000000e+00 : f32
    %31 = vector.shape_cast %30 : vector<10x18x1xi1> to vector<10x18x1xi1>
    %32 = vector.broadcast %31 : vector<10x18x1xi1> to vector<10x18x4xi1>
    %33 = vector.broadcast %cst_13 : f32 to vector<10x18x4xf32>
    %34 = arith.select %32, %14, %33 : vector<10x18x4xi1>, vector<10x18x4xf32>
    %35 = vector.extract_strided_slice %34 {offsets = [0, 0, 0], sizes = [10, 16, 4], strides = [1, 1, 1]} : vector<10x18x4xf32> to vector<10x16x4xf32>
    %36 = vector.extract_strided_slice %34 {offsets = [0, 1, 0], sizes = [10, 16, 4], strides = [1, 1, 1]} : vector<10x18x4xf32> to vector<10x16x4xf32>
    %37 = vector.extract_strided_slice %34 {offsets = [0, 2, 0], sizes = [10, 16, 4], strides = [1, 1, 1]} : vector<10x18x4xf32> to vector<10x16x4xf32>
    %38 = tpu.concatenate %35, %36, %37 in 2 : vector<10x16x4xf32>, vector<10x16x4xf32>, vector<10x16x4xf32> -> vector<10x16x12xf32>
    %39 = vector.extract_strided_slice %38 {offsets = [0, 0, 0], sizes = [8, 16, 12], strides = [1, 1, 1]} : vector<10x16x12xf32> to vector<8x16x12xf32>
    %40 = vector.extract_strided_slice %38 {offsets = [1, 0, 0], sizes = [8, 16, 12], strides = [1, 1, 1]} : vector<10x16x12xf32> to vector<8x16x12xf32>
    %41 = vector.extract_strided_slice %38 {offsets = [2, 0, 0], sizes = [8, 16, 12], strides = [1, 1, 1]} : vector<10x16x12xf32> to vector<8x16x12xf32>
    %42 = tpu.concatenate %39, %40, %41 in 2 : vector<8x16x12xf32>, vector<8x16x12xf32>, vector<8x16x12xf32> -> vector<8x16x36xf32>
    %43 = vector.shape_cast %42 : vector<8x16x36xf32> to vector<128x36xf32>
    %c0_14 = arith.constant 0 : index
    %c0_15 = arith.constant 0 : index
    %44 = vector.load %arg6[%c0_14, %c0_15] : memref<36x8xf32, #tpu.memory_space<vmem>>, vector<36x8xf32>
    %cst_16 = arith.constant dense<0.000000e+00> : vector<128x8xf32>
    %45 = tpu.matmul %43, %44, %cst_16 {dimension_numbers = #tpu.dot_dimension_numbers<[1], [0], [0], [1], [0, 0, 1, 1], [], []>} : vector<128x36xf32>, vector<36x8xf32>, vector<128x8xf32> -> vector<128x8xf32>
    %c0_17 = arith.constant 0 : index
    %c0_18 = arith.constant 0 : index
    %46 = vector.load %arg7[%c0_17, %c0_18] : memref<1x8xf32, #tpu.memory_space<vmem>>, vector<1x8xf32>
    %47 = vector.broadcast %46 : vector<1x8xf32> to vector<128x8xf32>
    %48 = arith.addf %45, %47 : vector<128x8xf32>
    %49 = tpu.transpose %48, [1, 0] : vector<128x8xf32> -> vector<8x128xf32>
    %c0_19 = arith.constant 0 : index
    %c0_20 = arith.constant 0 : index
    %c0_21 = arith.constant 0 : index
    %50 = vector.load %arg8[%c0_19, %c0_20, %c0_21] : memref<1x8x128xf32, #tpu.memory_space<vmem>>, vector<1x8x128xf32>
    %51 = vector.shape_cast %50 : vector<1x8x128xf32> to vector<8x128xf32>
    %52 = vector.shape_cast %49 : vector<8x128xf32> to vector<1x8x128xf32>
    tpu.vector_store %arg8[%c0_19, %c0_20, %c0_21], %52 {strides = array<i32>} : memref<1x8x128xf32, #tpu.memory_space<vmem>>, vector<1x8x128xf32>,
    return
  }
  func.func @transform_0(%arg0: i32, %arg1: i32) -> (i32, i32, i32, i32) {
    %c0_i32 = arith.constant 0 : i32
    %c0_i32_0 = arith.constant 0 : i32
    %c0_i32_1 = arith.constant 0 : i32
    return %arg0, %arg1, %c0_i32, %c0_i32_0 : i32, i32, i32, i32
  }
  func.func @transform_1(%arg0: i32, %arg1: i32) -> (i32, i32, i32, i32) {
    %c1_i32 = arith.constant 1 : i32
    %0 = arith.addi %arg1, %c1_i32 : i32
    %c4_i32 = arith.constant 4 : i32
    %1 = arith.muli %0, %c4_i32 : i32
    %c0_i32 = arith.constant 0 : i32
    %c0_i32_0 = arith.constant 0 : i32
    %c0_i32_1 = arith.constant 0 : i32
    return %arg0, %1, %c0_i32, %c0_i32_0 : i32, i32, i32, i32
  }
  func.func @transform_2(%arg0: i32, %arg1: i32) -> (i32, i32) {
    %c0_i32 = arith.constant 0 : i32
    %c0_i32_0 = arith.constant 0 : i32
    %c0_i32_1 = arith.constant 0 : i32
    return %c0_i32, %c0_i32_0 : i32, i32
  }
  func.func @transform_3(%arg0: i32, %arg1: i32) -> (i32, i32) {
    %c0_i32 = arith.constant 0 : i32
    %c0_i32_0 = arith.constant 0 : i32
    %c0_i32_1 = arith.constant 0 : i32
    return %c0_i32, %c0_i32_0 : i32, i32
  }
  func.func @transform_4(%arg0: i32, %arg1: i32) -> (i32, i32) {
    %c0_i32 = arith.constant 0 : i32
    %c0_i32_0 = arith.constant 0 : i32
    %c0_i32_1 = arith.constant 0 : i32
    return %c0_i32, %c0_i32_0 : i32, i32
  }
  func.func @transform_5(%arg0: i32, %arg1: i32) -> (i32, i32) {
    %c0_i32 = arith.constant 0 : i32
    %c0_i32_0 = arith.constant 0 : i32
    %c0_i32_1 = arith.constant 0 : i32
    return %c0_i32, %c0_i32_0 : i32, i32
  }
  func.func @transform_6(%arg0: i32, %arg1: i32) -> (i32, i32, i32) {
    %c0_i32 = arith.constant 0 : i32
    %c0_i32_0 = arith.constant 0 : i32
    return %arg0, %c0_i32, %arg1 : i32, i32, i32
  }
}

</mosaic_0001>

<llo_original>
// kernel: convolutional_block_forward.1
$region0: #{convolutional_block_forward.1}
  #allocation0 [shape = 'u32[]', space=smem, size = 0x4, offset = 0x4, fixed_abs, tag = 'smem constant byte address 0x4 - core index']
  #allocation1 [shape = 'u32[72,128]{1,0:T(1,128)}', space=vmem, size = 0x9000, scoped, tag = 'internal scratch']
  %s0 = inlined_call_operand.vmem [shape: f32[2,18,18,4], index: 0, kind: input, shape index: {}, may-alias: {0,1}]
  %s1 = inlined_call_operand.vmem [shape: f32[2,18,18,4], index: 1, kind: input, shape index: {}, may-alias: {0,1}]
  %s2 = inlined_call_operand.vmem [shape: f32[1,4], index: 2, kind: input, shape index: {}]
  %s3 = inlined_call_operand.vmem [shape: f32[1,4], index: 3, kind: input, shape index: {}]
  %s4 = inlined_call_operand.vmem [shape: f32[36,8], index: 4, kind: input, shape index: {}]
  %s5 = inlined_call_operand.vmem [shape: f32[1,8], index: 5, kind: input, shape index: {}]
  %s6 = inlined_call_operand.vmem [shape: f32[2,8,256], index: 6, kind: output, shape index: {}]
  %s7 = sld [smem:[#allocation0]]
  $region57: #{convolutional_block_forward.1} parent=0
    _
  %s9 = ssub.s32 1, %s7
  %s10 = scalar_select 0, %s9, %s7
  loop: start=0, step=1, limit=6
  $region2: #{convolutional_block_forward.1} parent=0 // loop_pre_header
    _
  $region3: #{convolutional_block_forward.1} parent=0 // loop_header
    %s12 = sphi 0, %s16
    %p13 = scmp.ge.s32.totalorder %s12, 6
    %s19 = sphi 0, %s31
    %s20 = sphi 0, %s27
    %s21 = sphi 0, %s19
    %s22 = sphi 0, %s20
    %s23 = sphi 0, %s21
    %s24 = sphi 0, %s22
    %s36 = sphi 0, %s38
    %s39 = sphi 0, %s36
    %s40 = sphi 0, %s39
    %s56 = sphi 0, %s40
    %s68 = sphi 0, %s70
    %s71 = sphi 0, %s68
    %s72 = sphi 0, %s71
    %s88 = sphi 0, %s72
    %s92 = sphi 0, %s92
    %s94 = sphi 0, %s92
    %s95 = sphi 0, %s94
    %s109 = sphi 0, %s95
    %s113 = sphi 0, %s113
    %s115 = sphi 0, %s113
    %s116 = sphi 0, %s115
    %s130 = sphi 0, %s116
    %s134 = sphi 0, %s134
    %s136 = sphi 0, %s134
    %s137 = sphi 0, %s136
    %s151 = sphi 0, %s137
    %s155 = sphi 0, %s155
    %s157 = sphi 0, %s155
    %s158 = sphi 0, %s157
    %s172 = sphi 0, %s158
    %s180 = sphi 0, %s182
    %s183 = sphi 0, %s180
    %s184 = sphi 0, %s183
    %s200 = sphi 0, %s184
  $region4: #{convolutional_block_forward.1} parent=0 // loop_header_branch
    %15 = sbr.rel (%p13) target = $region8
  $region5: #{convolutional_block_forward.1} parent=0 // loop_body
    %s17 = ssub.s32 %s12, 1
    %s18 = ssub.s32 %s12, 2
    %s25 = sadd.s32 1, %s20
    %p26 = scmp.ge.s32.totalorder %s25, 2
    %s27 = scalar_select %p26, 0, %s25
    %s28 = sadd.s32 1, %s19
    %s29 = scalar_select %p26, %s28, %s19
    %p30 = scmp.ge.s32.totalorder %s29, 2
    %s31 = scalar_select %p30, 0, %s29
    %s32 = ssub.s32 %s19, %s31
    %s33 = ssub.s32 %s20, %s27
    %s34 = sor.u32 %s32, %s33
    %p35 = scmp.eq.s32.totalorder %s34, 0
    %s37 = sadd.s32 %s36, 1
    %s38 = scalar_select %p35, %s36, %s37
    %p41 = pneg %p35
    %p42 = scmp.eq.s32.totalorder %s12, 3
    %p43 = por %p41, %p42
    %p44 = scmp.ne.s32.totalorder %s36, %s39
    %p45 = scmp.eq.s32.totalorder %s12, 0
    %p46 = por %p44, %p45
    %p47 = scmp.ne.s32.totalorder %s36, %s39
    %p48 = scmp.eq.s32.totalorder %s17, 3
    %p49 = por %p47, %p48
    %p50 = scmp.ne.s32.totalorder %s39, %s40
    %p51 = scmp.eq.s32.totalorder %s17, 0
    %p52 = por %p50, %p51
    %p53 = scmp.ne.s32.totalorder %s39, %s40
    %p54 = scmp.eq.s32.totalorder %s18, 3
    %p55 = por %p53, %p54
    %p57 = scmp.ne.s32.totalorder %s40, %s56
    %p58 = scmp.eq.s32.totalorder %s18, 0
    %p59 = por %p57, %p58
    %s60 = sadd.s32 %s20, 1
    %s61 = smul.u32 %s60, 4
    %s62 = sadd.s32 %s27, 1
    %s63 = smul.u32 %s62, 4
    %s64 = ssub.s32 %s19, %s31
    %s65 = ssub.s32 %s61, %s63
    %s66 = sor.u32 %s64, %s65
    %p67 = scmp.eq.s32.totalorder %s66, 0
    %s69 = sadd.s32 %s68, 1
    %s70 = scalar_select %p67, %s68, %s69
    %p73 = pneg %p67
    %p74 = scmp.eq.s32.totalorder %s12, 3
    %p75 = por %p73, %p74
    %p76 = scmp.ne.s32.totalorder %s68, %s71
    %p77 = scmp.eq.s32.totalorder %s12, 0
    %p78 = por %p76, %p77
    %p79 = scmp.ne.s32.totalorder %s68, %s71
    %p80 = scmp.eq.s32.totalorder %s17, 3
    %p81 = por %p79, %p80
    %p82 = scmp.ne.s32.totalorder %s71, %s72
    %p83 = scmp.eq.s32.totalorder %s17, 0
    %p84 = por %p82, %p83
    %p85 = scmp.ne.s32.totalorder %s71, %s72
    %p86 = scmp.eq.s32.totalorder %s18, 3
    %p87 = por %p85, %p86
    %p89 = scmp.ne.s32.totalorder %s72, %s88
    %p90 = scmp.eq.s32.totalorder %s18, 0
    %p91 = por %p89, %p90
    %s93 = sadd.s32 %s92, 1
    %p96 = scmp.eq.s32.totalorder %s12, 3
    %p97 = scmp.ne.s32.totalorder %s92, %s94
    %p98 = scmp.eq.s32.totalorder %s12, 0
    %p99 = por %p97, %p98
    %p100 = scmp.ne.s32.totalorder %s92, %s94
    %p101 = scmp.eq.s32.totalorder %s17, 3
    %p102 = por %p100, %p101
    %p103 = scmp.ne.s32.totalorder %s94, %s95
    %p104 = scmp.eq.s32.totalorder %s17, 0
    %p105 = por %p103, %p104
    %p106 = scmp.ne.s32.totalorder %s94, %s95
    %p107 = scmp.eq.s32.totalorder %s18, 3
    %p108 = por %p106, %p107
    %p110 = scmp.ne.s32.totalorder %s95, %s109
    %p111 = scmp.eq.s32.totalorder %s18, 0
    %p112 = por %p110, %p111
    %s114 = sadd.s32 %s113, 1
    %p117 = scmp.eq.s32.totalorder %s12, 3
    %p118 = scmp.ne.s32.totalorder %s113, %s115
    %p119 = scmp.eq.s32.totalorder %s12, 0
    %p120 = por %p118, %p119
    %p121 = scmp.ne.s32.totalorder %s113, %s115
    %p122 = scmp.eq.s32.totalorder %s17, 3
    %p123 = por %p121, %p122
    %p124 = scmp.ne.s32.totalorder %s115, %s116
    %p125 = scmp.eq.s32.totalorder %s17, 0
    %p126 = por %p124, %p125
    %p127 = scmp.ne.s32.totalorder %s115, %s116
    %p128 = scmp.eq.s32.totalorder %s18, 3
    %p129 = por %p127, %p128
    %p131 = scmp.ne.s32.totalorder %s116, %s130
    %p132 = scmp.eq.s32.totalorder %s18, 0
    %p133 = por %p131, %p132
    %s135 = sadd.s32 %s134, 1
    %p138 = scmp.eq.s32.totalorder %s12, 3
    %p139 = scmp.ne.s32.totalorder %s134, %s136
    %p140 = scmp.eq.s32.totalorder %s12, 0
    %p141 = por %p139, %p140
    %p142 = scmp.ne.s32.totalorder %s134, %s136
    %p143 = scmp.eq.s32.totalorder %s17, 3
    %p144 = por %p142, %p143
    %p145 = scmp.ne.s32.totalorder %s136, %s137
    %p146 = scmp.eq.s32.totalorder %s17, 0
    %p147 = por %p145, %p146
    %p148 = scmp.ne.s32.totalorder %s136, %s137
    %p149 = scmp.eq.s32.totalorder %s18, 3
    %p150 = por %p148, %p149
    %p152 = scmp.ne.s32.totalorder %s137, %s151
    %p153 = scmp.eq.s32.totalorder %s18, 0
    %p154 = por %p152, %p153
    %s156 = sadd.s32 %s155, 1
    %p159 = scmp.eq.s32.totalorder %s12, 3
    %p160 = scmp.ne.s32.totalorder %s155, %s157
    %p161 = scmp.eq.s32.totalorder %s12, 0
    %p162 = por %p160, %p161
    %p163 = scmp.ne.s32.totalorder %s155, %s157
    %p164 = scmp.eq.s32.totalorder %s17, 3
    %p165 = por %p163, %p164
    %p166 = scmp.ne.s32.totalorder %s157, %s158
    %p167 = scmp.eq.s32.totalorder %s17, 0
    %p168 = por %p166, %p167
    %p169 = scmp.ne.s32.totalorder %s157, %s158
    %p170 = scmp.eq.s32.totalorder %s18, 3
    %p171 = por %p169, %p170
    %p173 = scmp.ne.s32.totalorder %s158, %s172
    %p174 = scmp.eq.s32.totalorder %s18, 0
    %p175 = por %p173, %p174
    %s176 = ssub.s32 %s19, %s31
    %s177 = ssub.s32 %s20, %s27
    %s178 = sor.u32 %s176, %s177
    %p179 = scmp.eq.s32.totalorder %s178, 0
    %s181 = sadd.s32 %s180, 1
    %s182 = scalar_select %p179, %s180, %s181
    %p185 = pneg %p179
    %p186 = scmp.eq.s32.totalorder %s12, 3
    %p187 = por %p185, %p186
    %p188 = scmp.ne.s32.totalorder %s180, %s183
    %p189 = scmp.eq.s32.totalorder %s12, 0
    %p190 = por %p188, %p189
    %p191 = scmp.ne.s32.totalorder %s180, %s183
    %p192 = scmp.eq.s32.totalorder %s17, 3
    %p193 = por %p191, %p192
    %p194 = scmp.ne.s32.totalorder %s183, %s184
    %p195 = scmp.eq.s32.totalorder %s17, 0
    %p196 = por %p194, %p195
    %p197 = scmp.ne.s32.totalorder %s183, %s184
    %p198 = scmp.eq.s32.totalorder %s18, 3
    %p199 = por %p197, %p198
    %p201 = scmp.ne.s32.totalorder %s184, %s200
    %p202 = scmp.eq.s32.totalorder %s18, 0
    %p203 = por %p201, %p202
    %p204 = scmp.le.s32.totalorder 1, %s12
    %p205 = scmp.lt.s32.totalorder %s12, 5
    %p206 = pnand %p204, %p205
    %p207 = pneg %p206
    // Predicated region
    $region9: #{convolutional_block_forward.1} parent=5 // pred_check
      _
    $region10: #{convolutional_block_forward.1} parent=5 // pred_check_branch
      %209 = sbr.rel (%p206) target = $region12
    $region11: #{convolutional_block_forward.1} parent=5 // pred_region
      %s210 = ssub.s32 %s12, 1
      // Predicated region
      $region13: #{convolutional_block_forward.1} parent=11 // pred_check
        %p211 = pneg %p105
      $region14: #{convolutional_block_forward.1} parent=11 // pred_check_branch
        %213 = sbr.rel (%p211) target = $region16
      $region15: #{convolutional_block_forward.1} parent=11 // pred_region
        _
      $region16: #{convolutional_block_forward.1} parent=11 // pred_fallthru
        _
      // Predicated region
      $region17: #{convolutional_block_forward.1} parent=11 // pred_check
        %p214 = pneg %p126
      $region18: #{convolutional_block_forward.1} parent=11 // pred_check_branch
        %216 = sbr.rel (%p214) target = $region20
      $region19: #{convolutional_block_forward.1} parent=11 // pred_region
        _
      $region20: #{convolutional_block_forward.1} parent=11 // pred_fallthru
        _
      // Predicated region
      $region21: #{convolutional_block_forward.1} parent=11 // pred_check
        %p217 = pneg %p147
      $region22: #{convolutional_block_forward.1} parent=11 // pred_check_branch
        %219 = sbr.rel (%p217) target = $region24
      $region23: #{convolutional_block_forward.1} parent=11 // pred_region
        _
      $region24: #{convolutional_block_forward.1} parent=11 // pred_fallthru
        _
      // Predicated region
      $region25: #{convolutional_block_forward.1} parent=11 // pred_check
        %p220 = pneg %p168
      $region26: #{convolutional_block_forward.1} parent=11 // pred_check_branch
        %222 = sbr.rel (%p220) target = $region28
      $region27: #{convolutional_block_forward.1} parent=11 // pred_region
        _
      $region28: #{convolutional_block_forward.1} parent=11 // pred_fallthru
        _
    $region12: #{convolutional_block_forward.1} parent=5 // pred_fallthru
      _
    %p223 = scmp.lt.s32.totalorder %s12, 4
    // Predicated region
    $region29: #{convolutional_block_forward.1} parent=5 // pred_check
      %p224 = pneg %p223
    $region30: #{convolutional_block_forward.1} parent=5 // pred_check_branch
      %226 = sbr.rel (%p224) target = $region32
    $region31: #{convolutional_block_forward.1} parent=5 // pred_region
      // Predicated region
      $region33: #{convolutional_block_forward.1} parent=31 // pred_check
        %p227 = pneg %p46
      $region34: #{convolutional_block_forward.1} parent=31 // pred_check_branch
        %229 = sbr.rel (%p227) target = $region36
      $region35: #{convolutional_block_forward.1} parent=31 // pred_region
        %s230 = smul.u32 8, %s20
        %s231 = ssub.s32 18, %s230
        %p232 = scmp.lt.s32.totalorder %s231, 8
        %s233 = scalar_select %p232, %s231, 8
        %s234 = smul.u32 8, %s233
        %s235 = smul.u32 %s234, 3
        %p236 = scmp.lt.s32.totalorder %s19, 1
        %s237 = scalar_select %p236, %s19, 1
        %p238 = scmp.lt.s32.totalorder %s230, 17
        %s239 = scalar_select %p238, %s230, 17
        %s240 = smul.addr %s239, 3
        %s241 = smul.addr %s237, 54
        %s242 = sadd.s32 %s240, %s241
        %s243 = smul.addr %s242, 8
        %s244 = scalar_lea.vmem %s0, %s243
        %s245 = smul.u32 8, %s20
        %s246 = ssub.s32 18, %s245
        %p247 = scmp.lt.s32.totalorder %s246, 8
        %s248 = scalar_select %p247, %s246, 8
        %s249 = smul.u32 8, %s248
        %s250 = smul.u32 %s249, 3
      $region36: #{convolutional_block_forward.1} parent=31 // pred_fallthru
        _
      // Predicated region
      $region37: #{convolutional_block_forward.1} parent=31 // pred_check
        %p251 = pneg %p78
      $region38: #{convolutional_block_forward.1} parent=31 // pred_check_branch
        %253 = sbr.rel (%p251) target = $region40
      $region39: #{convolutional_block_forward.1} parent=31 // pred_region
        %s254 = sadd.s32 %s20, 1
        %s255 = smul.u32 %s254, 4
        %s256 = smul.u32 2, %s255
        %p257 = scmp.lt.s32.totalorder %s19, 1
        %s258 = scalar_select %p257, %s19, 1
        %p259 = scmp.lt.s32.totalorder %s256, 17
        %s260 = scalar_select %p259, %s256, 17
        %s261 = smul.addr %s260, 3
        %s262 = smul.addr %s258, 54
        %s263 = sadd.s32 %s261, %s262
        %s264 = smul.addr %s263, 8
        %s265 = scalar_lea.vmem %s1, %s264
        %s266 = sadd.s32 %s20, 1
        %s267 = smul.u32 %s266, 4
        %s268 = smul.u32 2, %s267
      $region40: #{convolutional_block_forward.1} parent=31 // pred_fallthru
        _
    $region32: #{convolutional_block_forward.1} parent=5 // pred_fallthru
      _
    %p269 = scmp.le.s32.totalorder 1, %s12
    %p270 = scmp.lt.s32.totalorder %s12, 5
    %p271 = pnand %p269, %p270
    %p272 = pneg %p271
    // Predicated region
    $region41: #{convolutional_block_forward.1} parent=5 // pred_check
      _
    $region42: #{convolutional_block_forward.1} parent=5 // pred_check_branch
      %274 = sbr.rel (%p271) target = $region44
    $region43: #{convolutional_block_forward.1} parent=5 // pred_region
      %s275 = ssub.s32 %s12, 1
      %s276 = smul.u32 8, %s22
      %s277 = ssub.s32 18, %s276
      %p278 = scmp.lt.s32.totalorder %s277, 8
      %s279 = scalar_select %p278, %s277, 8
      %s280 = smul.u32 8, %s279
      %s281 = smul.u32 %s280, 3
      %p282 = scmp.lt.s32.totalorder %s21, 1
      %s283 = scalar_select %p282, %s21, 1
      %p284 = scmp.lt.s32.totalorder %s276, 17
      %s285 = scalar_select %p284, %s276, 17
      %s286 = smul.addr %s285, 3
      %s287 = smul.addr %s283, 54
      %s288 = sadd.s32 %s286, %s287
      %s289 = smul.addr %s288, 8
      %s290 = scalar_lea.vmem %s0, %s289
      %p291 = pneg %p52
      %p292 = pneg %p49
      %s293 = sadd.s32 %s22, 1
      %s294 = smul.u32 %s293, 4
      %s295 = smul.u32 2, %s294
      %p296 = scmp.lt.s32.totalorder %s21, 1
      %s297 = scalar_select %p296, %s21, 1
      %p298 = scmp.lt.s32.totalorder %s295, 17
      %s299 = scalar_select %p298, %s295, 17
      %s300 = smul.addr %s299, 3
      %s301 = smul.addr %s297, 54
      %s302 = sadd.s32 %s300, %s301
      %s303 = smul.addr %s302, 8
      %s304 = scalar_lea.vmem %s1, %s303
      %p305 = pneg %p84
      %p306 = pneg %p81
      %p307 = pneg %p105
      %p308 = pneg %p102
      %p309 = pneg %p126
      %p310 = pneg %p123
      %p311 = pneg %p147
      %p312 = pneg %p144
      %p313 = pneg %p168
      %p314 = pneg %p165
      %p315 = pneg %p196
      %p316 = pneg %p193
      %p317 = scmp.lt.s32.totalorder %s21, 1
      %s318 = scalar_select %p317, %s21, 1
      %p319 = scmp.lt.s32.totalorder %s22, 1
      %s320 = scalar_select %p319, %s22, 1
      %s321 = smul.addr %s318, 2
      %s322 = sadd.s32 %s320, %s321
      %s323 = smul.addr %s322, 8
      %s324 = scalar_lea.vmem %s6, %s323
      %s325 = smul.u32 8, %s22
      %s326 = ssub.s32 18, %s325
      %p327 = scmp.lt.s32.totalorder %s326, 8
      %s328 = scalar_select %p327, %s326, 8
      %s329 = smul.u32 8, %s328
      %s330 = smul.u32 %s329, 3
      %p331 = scmp.lt.s32.totalorder %s21, 1
      %s332 = scalar_select %p331, %s21, 1
      %p333 = scmp.lt.s32.totalorder %s325, 17
      %s334 = scalar_select %p333, %s325, 17
      %s335 = smul.addr %s334, 3
      %s336 = smul.addr %s332, 54
      %s337 = sadd.s32 %s335, %s336
      %s338 = smul.addr %s337, 8
      %s339 = scalar_lea.vmem %s0, %s338
      %s340 = smul.u32 8, %s22
      %s341 = ssub.s32 18, %s340
      %p342 = scmp.lt.s32.totalorder %s341, 8
      %s343 = scalar_select %p342, %s341, 8
      %s344 = smul.u32 8, %s343
      %s345 = smul.u32 %s344, 3
      %s346 = sadd.s32 %s22, 1
      %s347 = smul.u32 %s346, 4
      %s348 = smul.u32 2, %s347
      %p349 = scmp.lt.s32.totalorder %s21, 1
      %s350 = scalar_select %p349, %s21, 1
      %p351 = scmp.lt.s32.totalorder %s348, 17
      %s352 = scalar_select %p351, %s348, 17
      %s353 = smul.addr %s352, 3
      %s354 = smul.addr %s350, 54
      %s355 = sadd.s32 %s353, %s354
      %s356 = smul.addr %s355, 8
      %s357 = scalar_lea.vmem %s1, %s356
      %s358 = sadd.s32 %s22, 1
      %s359 = smul.u32 %s358, 4
      %s360 = smul.u32 2, %s359
      %p361 = scmp.lt.s32.totalorder %s21, 1
      %s362 = scalar_select %p361, %s21, 1
      %p363 = scmp.lt.s32.totalorder %s22, 1
      %s364 = scalar_select %p363, %s22, 1
      %s365 = smul.addr %s362, 2
      %s366 = sadd.s32 %s364, %s365
      %s367 = smul.addr %s366, 8
      %s368 = scalar_lea.vmem %s6, %s367
      %v369 = vld [vmem:[%s339] sm:$0xff]
      %v370 = vld [vmem:[%s339 + $0x8] sm:$0xff]
      %v371 = vld [vmem:[%s339 + $0x10] sm:$0x3]
      %v372 = vld [vmem:[%s339 + $0x18] sm:$0xff]
      %v373 = vld [vmem:[%s339 + $0x20] sm:$0xff]
      %v374 = vld [vmem:[%s339 + $0x28] sm:$0x3]
      %v375 = vld [vmem:[%s339 + $0x30] sm:$0xff]
      %v376 = vld [vmem:[%s339 + $0x38] sm:$0xff]
      %v377 = vld [vmem:[%s339 + $0x40] sm:$0x3]
      %v378 = vld [vmem:[%s339 + $0x48] sm:$0xff]
      %v379 = vld [vmem:[%s339 + $0x50] sm:$0xff]
      %v380 = vld [vmem:[%s339 + $0x58] sm:$0x3]
      %v381 = vld [vmem:[%s339 + $0x60] sm:$0xff]
      %v382 = vld [vmem:[%s339 + $0x68] sm:$0xff]
      %v383 = vld [vmem:[%s339 + $0x70] sm:$0x3]
      %v384 = vld [vmem:[%s339 + $0x78] sm:$0xff]
      %v385 = vld [vmem:[%s339 + $0x80] sm:$0xff]
      %v386 = vld [vmem:[%s339 + $0x88] sm:$0x3]
      %v387 = vld [vmem:[%s339 + $0x90] sm:$0xff]
      %v388 = vld [vmem:[%s339 + $0x98] sm:$0xff]
      %v389 = vld [vmem:[%s339 + $0xa0] sm:$0x3]
      %v390 = vld [vmem:[%s339 + $0xa8] sm:$0xff]
      %v391 = vld [vmem:[%s339 + $0xb0] sm:$0xff]
      %v392 = vld [vmem:[%s339 + $0xb8] sm:$0x3]
      %v393 = vld [vmem:[%s357] sm:$0xff]
      %v394 = vld [vmem:[%s357 + $0x8] sm:$0xff]
      %v395 = vld [vmem:[%s357 + $0x10] sm:$0x3]
      %v396 = vld [vmem:[%s357 + $0x18] sm:$0xff]
      %v397 = vld [vmem:[%s357 + $0x20] sm:$0xff]
      %v398 = vld [vmem:[%s357 + $0x28] sm:$0x3]
      %v399 = vld [vmem:[%s2] sm:$0x1]
      %v401 = vperm.slane %v399, 0
      %v403 = vmul.f32 %v369, %v401
      %v404 = vmul.f32 %v370, %v401
      %v405 = vmul.f32 %v371, %v401
      %v406 = vmul.f32 %v372, %v401
      %v407 = vmul.f32 %v373, %v401
      %v408 = vmul.f32 %v374, %v401
      %v409 = vmul.f32 %v375, %v401
      %v410 = vmul.f32 %v376, %v401
      %v411 = vmul.f32 %v377, %v401
      %v412 = vmul.f32 %v378, %v401
      %v413 = vmul.f32 %v379, %v401
      %v414 = vmul.f32 %v380, %v401
      %v415 = vmul.f32 %v381, %v401
      %v416 = vmul.f32 %v382, %v401
      %v417 = vmul.f32 %v383, %v401
      %v418 = vmul.f32 %v384, %v401
      %v419 = vmul.f32 %v385, %v401
      %v420 = vmul.f32 %v386, %v401
      %v421 = vmul.f32 %v387, %v401
      %v422 = vmul.f32 %v388, %v401
      %v423 = vmul.f32 %v389, %v401
      %v424 = vmul.f32 %v390, %v401
      %v425 = vmul.f32 %v391, %v401
      %v426 = vmul.f32 %v392, %v401
      %v427 = vmul.f32 %v393, %v401
      %v428 = vmul.f32 %v394, %v401
      %v429 = vmul.f32 %v395, %v401
      %v430 = vmul.f32 %v396, %v401
      %v431 = vmul.f32 %v397, %v401
      %v432 = vmul.f32 %v398, %v401
      %v433 = vld [vmem:[%s3] sm:$0x1]
      %v435 = vperm.slane %v433, 0
      %v437 = vadd.f32 %v403, %v435
      %v438 = vadd.f32 %v404, %v435
      %v439 = vadd.f32 %v405, %v435
      %v440 = vadd.f32 %v406, %v435
      %v441 = vadd.f32 %v407, %v435
      %v442 = vadd.f32 %v408, %v435
      %v443 = vadd.f32 %v409, %v435
      %v444 = vadd.f32 %v410, %v435
      %v445 = vadd.f32 %v411, %v435
      %v446 = vadd.f32 %v412, %v435
      %v447 = vadd.f32 %v413, %v435
      %v448 = vadd.f32 %v414, %v435
      %v449 = vadd.f32 %v415, %v435
      %v450 = vadd.f32 %v416, %v435
      %v451 = vadd.f32 %v417, %v435
      %v452 = vadd.f32 %v418, %v435
      %v453 = vadd.f32 %v419, %v435
      %v454 = vadd.f32 %v420, %v435
      %v455 = vadd.f32 %v421, %v435
      %v456 = vadd.f32 %v422, %v435
      %v457 = vadd.f32 %v423, %v435
      %v458 = vadd.f32 %v424, %v435
      %v459 = vadd.f32 %v425, %v435
      %v460 = vadd.f32 %v426, %v435
      %v461 = vadd.f32 %v427, %v435
      %v462 = vadd.f32 %v428, %v435
      %v463 = vadd.f32 %v429, %v435
      %v464 = vadd.f32 %v430, %v435
      %v465 = vadd.f32 %v431, %v435
      %v466 = vadd.f32 %v432, %v435
      %v467 = vmax.f32 %v437, 0.0
      %v468 = vmax.f32 %v438, 0.0
      %v469 = vmax.f32 %v439, 0.0
      %v470 = vmax.f32 %v440, 0.0
      %v471 = vmax.f32 %v441, 0.0
      %v472 = vmax.f32 %v442, 0.0
      %v473 = vmax.f32 %v443, 0.0
      %v474 = vmax.f32 %v444, 0.0
      %v475 = vmax.f32 %v445, 0.0
      %v476 = vmax.f32 %v446, 0.0
      %v477 = vmax.f32 %v447, 0.0
      %v478 = vmax.f32 %v448, 0.0
      %v479 = vmax.f32 %v449, 0.0
      %v480 = vmax.f32 %v450, 0.0
      %v481 = vmax.f32 %v451, 0.0
      %v482 = vmax.f32 %v452, 0.0
      %v483 = vmax.f32 %v453, 0.0
      %v484 = vmax.f32 %v454, 0.0
      %v485 = vmax.f32 %v455, 0.0
      %v486 = vmax.f32 %v456, 0.0
      %v487 = vmax.f32 %v457, 0.0
      %v488 = vmax.f32 %v458, 0.0
      %v489 = vmax.f32 %v459, 0.0
      %v490 = vmax.f32 %v460, 0.0
      %v491 = vmax.f32 %v461, 0.0
      %v492 = vmax.f32 %v462, 0.0
      %v493 = vmax.f32 %v463, 0.0
      %v494 = vmax.f32 %v464, 0.0
      %v495 = vmax.f32 %v465, 0.0
      %v496 = vmax.f32 %v466, 0.0
      %s497 = smul.u32 %s22, 8
      %v498 = vstv %s497
      %v499 = vadd.s32 %v498, 1
      %v500 = vadd.s32 %v498, 2
      %v501 = vadd.s32 %v498, 3
      %v502 = vadd.s32 %v498, 4
      %v503 = vadd.s32 %v498, 5
      %v504 = vadd.s32 %v498, 6
      %v505 = vadd.s32 %v498, 7
      %v506 = vadd.s32 %v498, 8
      %v507 = vadd.s32 %v498, 9
      %v508 = vlaneseq
      %v509 = vshrl.u32 %v508, 7
      %v510 = vadd.s32 %v509, 8
      %v511 = vadd.s32 %v509, 16
      %vm512 = vcmp.ge.s32.totalorder %v498, 1
      %vm513 = vcmp.ge.s32.totalorder %v499, 1
      %vm514 = vcmp.ge.s32.totalorder %v500, 1
      %vm515 = vcmp.ge.s32.totalorder %v501, 1
      %vm516 = vcmp.ge.s32.totalorder %v502, 1
      %vm517 = vcmp.ge.s32.totalorder %v503, 1
      %vm518 = vcmp.ge.s32.totalorder %v504, 1
      %vm519 = vcmp.ge.s32.totalorder %v505, 1
      %vm520 = vcmp.ge.s32.totalorder %v506, 1
      %vm521 = vcmp.ge.s32.totalorder %v507, 1
      %vm522 = vcmp.le.s32.totalorder %v498, 16
      %vm523 = vcmp.le.s32.totalorder %v499, 16
      %vm524 = vcmp.le.s32.totalorder %v500, 16
      %vm525 = vcmp.le.s32.totalorder %v501, 16
      %vm526 = vcmp.le.s32.totalorder %v502, 16
      %vm527 = vcmp.le.s32.totalorder %v503, 16
      %vm528 = vcmp.le.s32.totalorder %v504, 16
      %vm529 = vcmp.le.s32.totalorder %v505, 16
      %vm530 = vcmp.le.s32.totalorder %v506, 16
      %vm531 = vcmp.le.s32.totalorder %v507, 16
      %vm532 = vmand %vm512, %vm522
      %vm533 = vmand %vm513, %vm523
      %vm534 = vmand %vm514, %vm524
      %vm535 = vmand %vm515, %vm525
      %vm536 = vmand %vm516, %vm526
      %vm537 = vmand %vm517, %vm527
      %vm538 = vmand %vm518, %vm528
      %vm539 = vmand %vm519, %vm529
      %vm540 = vmand %vm520, %vm530
      %vm541 = vmand %vm521, %vm531
      %vm542 = vcmp.ge.s32.totalorder %v509, 1
      %vm543 = vcmp.ge.s32.totalorder %v510, 1
      %vm544 = vcmp.ge.s32.totalorder %v511, 1
      %vm545 = vmand %vm532, %vm542
      %vm546 = vmand %vm532, %vm543
      %vm547 = vmand %vm532, %vm544
      %vm548 = vmand %vm533, %vm542
      %vm549 = vmand %vm533, %vm543
      %vm550 = vmand %vm533, %vm544
      %vm551 = vmand %vm534, %vm542
      %vm552 = vmand %vm534, %vm543
      %vm553 = vmand %vm534, %vm544
      %vm554 = vmand %vm535, %vm542
      %vm555 = vmand %vm535, %vm543
      %vm556 = vmand %vm535, %vm544
      %vm557 = vmand %vm536, %vm542
      %vm558 = vmand %vm536, %vm543
      %vm559 = vmand %vm536, %vm544
      %vm560 = vmand %vm537, %vm542
      %vm561 = vmand %vm537, %vm543
      %vm562 = vmand %vm537, %vm544
      %vm563 = vmand %vm538, %vm542
      %vm564 = vmand %vm538, %vm543
      %vm565 = vmand %vm538, %vm544
      %vm566 = vmand %vm539, %vm542
      %vm567 = vmand %vm539, %vm543
      %vm568 = vmand %vm539, %vm544
      %vm569 = vmand %vm540, %vm542
      %vm570 = vmand %vm540, %vm543
      %vm571 = vmand %vm540, %vm544
      %vm572 = vmand %vm541, %vm542
      %vm573 = vmand %vm541, %vm543
      %vm574 = vmand %vm541, %vm544
      %vm575 = vcmp.le.s32.totalorder %v509, 16
      %vm576 = vcmp.le.s32.totalorder %v510, 16
      %vm577 = vcmp.le.s32.totalorder %v511, 16
      %vm578 = vmand %vm545, %vm575
      %vm579 = vmand %vm546, %vm576
      %vm580 = vmand %vm547, %vm577
      %vm581 = vmand %vm548, %vm575
      %vm582 = vmand %vm549, %vm576
      %vm583 = vmand %vm550, %vm577
      %vm584 = vmand %vm551, %vm575
      %vm585 = vmand %vm552, %vm576
      %vm586 = vmand %vm553, %vm577
      %vm587 = vmand %vm554, %vm575
      %vm588 = vmand %vm555, %vm576
      %vm589 = vmand %vm556, %vm577
      %vm590 = vmand %vm557, %vm575
      %vm591 = vmand %vm558, %vm576
      %vm592 = vmand %vm559, %vm577
      %vm593 = vmand %vm560, %vm575
      %vm594 = vmand %vm561, %vm576
      %vm595 = vmand %vm562, %vm577
      %vm596 = vmand %vm563, %vm575
      %vm597 = vmand %vm564, %vm576
      %vm598 = vmand %vm565, %vm577
      %vm599 = vmand %vm566, %vm575
      %vm600 = vmand %vm567, %vm576
      %vm601 = vmand %vm568, %vm577
      %vm602 = vmand %vm569, %vm575
      %vm603 = vmand %vm570, %vm576
      %vm604 = vmand %vm571, %vm577
      %vm605 = vmand %vm572, %vm575
      %vm606 = vmand %vm573, %vm576
      %vm607 = vmand %vm574, %vm577
      %v608 = vsel %vm578, 1, 0
      %v609 = vsel %vm579, 1, 0
      %v610 = vsel %vm580, 1, 0
      %v611 = vsel %vm581, 1, 0
      %v612 = vsel %vm582, 1, 0
      %v613 = vsel %vm583, 1, 0
      %v614 = vsel %vm584, 1, 0
      %v615 = vsel %vm585, 1, 0
      %v616 = vsel %vm586, 1, 0
      %v617 = vsel %vm587, 1, 0
      %v618 = vsel %vm588, 1, 0
      %v619 = vsel %vm589, 1, 0
      %v620 = vsel %vm590, 1, 0
      %v621 = vsel %vm591, 1, 0
      %v622 = vsel %vm592, 1, 0
      %v623 = vsel %vm593, 1, 0
      %v624 = vsel %vm594, 1, 0
      %v625 = vsel %vm595, 1, 0
      %v626 = vsel %vm596, 1, 0
      %v627 = vsel %vm597, 1, 0
      %v628 = vsel %vm598, 1, 0
      %v629 = vsel %vm599, 1, 0
      %v630 = vsel %vm600, 1, 0
      %v631 = vsel %vm601, 1, 0
      %v632 = vsel %vm602, 1, 0
      %v633 = vsel %vm603, 1, 0
      %v634 = vsel %vm604, 1, 0
      %v635 = vsel %vm605, 1, 0
      %v636 = vsel %vm606, 1, 0
      %v637 = vsel %vm607, 1, 0
      %vm638 = vcmp.eq.s32.totalorder %v608, 1
      %vm639 = vcmp.eq.s32.totalorder %v609, 1
      %vm640 = vcmp.eq.s32.totalorder %v610, 1
      %vm641 = vcmp.eq.s32.totalorder %v611, 1
      %vm642 = vcmp.eq.s32.totalorder %v612, 1
      %vm643 = vcmp.eq.s32.totalorder %v613, 1
      %vm644 = vcmp.eq.s32.totalorder %v614, 1
      %vm645 = vcmp.eq.s32.totalorder %v615, 1
      %vm646 = vcmp.eq.s32.totalorder %v616, 1
      %vm647 = vcmp.eq.s32.totalorder %v617, 1
      %vm648 = vcmp.eq.s32.totalorder %v618, 1
      %vm649 = vcmp.eq.s32.totalorder %v619, 1
      %vm650 = vcmp.eq.s32.totalorder %v620, 1
      %vm651 = vcmp.eq.s32.totalorder %v621, 1
      %vm652 = vcmp.eq.s32.totalorder %v622, 1
      %vm653 = vcmp.eq.s32.totalorder %v623, 1
      %vm654 = vcmp.eq.s32.totalorder %v624, 1
      %vm655 = vcmp.eq.s32.totalorder %v625, 1
      %vm656 = vcmp.eq.s32.totalorder %v626, 1
      %vm657 = vcmp.eq.s32.totalorder %v627, 1
      %vm658 = vcmp.eq.s32.totalorder %v628, 1
      %vm659 = vcmp.eq.s32.totalorder %v629, 1
      %vm660 = vcmp.eq.s32.totalorder %v630, 1
      %vm661 = vcmp.eq.s32.totalorder %v631, 1
      %vm662 = vcmp.eq.s32.totalorder %v632, 1
      %vm663 = vcmp.eq.s32.totalorder %v633, 1
      %vm664 = vcmp.eq.s32.totalorder %v634, 1
      %vm665 = vcmp.eq.s32.totalorder %v635, 1
      %vm666 = vcmp.eq.s32.totalorder %v636, 1
      %vm667 = vcmp.eq.s32.totalorder %v637, 1
      %v668 = vsel %vm638, %v467, 0.0
      %v669 = vsel %vm639, %v468, 0.0
      %v670 = vsel %vm640, %v469, 0.0
      %v671 = vsel %vm641, %v470, 0.0
      %v672 = vsel %vm642, %v471, 0.0
      %v673 = vsel %vm643, %v472, 0.0
      %v674 = vsel %vm644, %v473, 0.0
      %v675 = vsel %vm645, %v474, 0.0
      %v676 = vsel %vm646, %v475, 0.0
      %v677 = vsel %vm647, %v476, 0.0
      %v678 = vsel %vm648, %v477, 0.0
      %v679 = vsel %vm649, %v478, 0.0
      %v680 = vsel %vm650, %v479, 0.0
      %v681 = vsel %vm651, %v480, 0.0
      %v682 = vsel %vm652, %v481, 0.0
      %v683 = vsel %vm653, %v482, 0.0
      %v684 = vsel %vm654, %v483, 0.0
      %v685 = vsel %vm655, %v484, 0.0
      %v686 = vsel %vm656, %v485, 0.0
      %v687 = vsel %vm657, %v486, 0.0
      %v688 = vsel %vm658, %v487, 0.0
      %v689 = vsel %vm659, %v488, 0.0
      %v690 = vsel %vm660, %v489, 0.0
      %v691 = vsel %vm661, %v490, 0.0
      %v692 = vsel %vm662, %v491, 0.0
      %v693 = vsel %vm663, %v492, 0.0
      %v694 = vsel %vm664, %v493, 0.0
      %v695 = vsel %vm665, %v494, 0.0
      %v696 = vsel %vm666, %v495, 0.0
      %v697 = vsel %vm667, %v496, 0.0
      %vm728 = vcmask 1046528
      %v729 = vrot.slane %v668, 1
      %v730 = vrot.slane %v669, 1
      %v731 = vsel %vm728, %v729, %v730
      %v732 = vrot.slane %v670, 1
      %v733 = vsel %vm728, %v730, %v732
      %v734 = vrot.slane %v671, 1
      %v735 = vrot.slane %v672, 1
      %v736 = vsel %vm728, %v734, %v735
      %v737 = vrot.slane %v673, 1
      %v738 = vsel %vm728, %v735, %v737
      %v739 = vrot.slane %v674, 1
      %v740 = vrot.slane %v675, 1
      %v741 = vsel %vm728, %v739, %v740
      %v742 = vrot.slane %v676, 1
      %v743 = vsel %vm728, %v740, %v742
      %v744 = vrot.slane %v677, 1
      %v745 = vrot.slane %v678, 1
      %v746 = vsel %vm728, %v744, %v745
      %v747 = vrot.slane %v679, 1
      %v748 = vsel %vm728, %v745, %v747
      %v749 = vrot.slane %v680, 1
      %v750 = vrot.slane %v681, 1
      %v751 = vsel %vm728, %v749, %v750
      %v752 = vrot.slane %v682, 1
      %v753 = vsel %vm728, %v750, %v752
      %v754 = vrot.slane %v683, 1
      %v755 = vrot.slane %v684, 1
      %v756 = vsel %vm728, %v754, %v755
      %v757 = vrot.slane %v685, 1
      %v758 = vsel %vm728, %v755, %v757
      %v759 = vrot.slane %v686, 1
      %v760 = vrot.slane %v687, 1
      %v761 = vsel %vm728, %v759, %v760
      %v762 = vrot.slane %v688, 1
      %v763 = vsel %vm728, %v760, %v762
      %v764 = vrot.slane %v689, 1
      %v765 = vrot.slane %v690, 1
      %v766 = vsel %vm728, %v764, %v765
      %v767 = vrot.slane %v691, 1
      %v768 = vsel %vm728, %v765, %v767
      %v769 = vrot.slane %v692, 1
      %v770 = vrot.slane %v693, 1
      %v771 = vsel %vm728, %v769, %v770
      %v772 = vrot.slane %v694, 1
      %v773 = vsel %vm728, %v770, %v772
      %v774 = vrot.slane %v695, 1
      %v775 = vrot.slane %v696, 1
      %v776 = vsel %vm728, %v774, %v775
      %v777 = vrot.slane %v697, 1
      %v778 = vsel %vm728, %v775, %v777
      %779 = vrot.lane.b32.xlu0 %v731, 4
      %v780 = vpop.permute.xlu0 %779
      %781 = vrot.lane.b32.xlu0 %v733, 4
      %v782 = vpop.permute.xlu0 %781
      %783 = vrot.lane.b32.xlu0 %v736, 4
      %v784 = vpop.permute.xlu0 %783
      %785 = vrot.lane.b32.xlu0 %v738, 4
      %v786 = vpop.permute.xlu0 %785
      %787 = vrot.lane.b32.xlu0 %v741, 4
      %v788 = vpop.permute.xlu0 %787
      %789 = vrot.lane.b32.xlu0 %v743, 4
      %v790 = vpop.permute.xlu0 %789
      %791 = vrot.lane.b32.xlu0 %v746, 4
      %v792 = vpop.permute.xlu0 %791
      %793 = vrot.lane.b32.xlu0 %v748, 4
      %v794 = vpop.permute.xlu0 %793
      %795 = vrot.lane.b32.xlu0 %v751, 4
      %v796 = vpop.permute.xlu0 %795
      %797 = vrot.lane.b32.xlu0 %v753, 4
      %v798 = vpop.permute.xlu0 %797
      %799 = vrot.lane.b32.xlu0 %v756, 4
      %v800 = vpop.permute.xlu0 %799
      %801 = vrot.lane.b32.xlu0 %v758, 4
      %v802 = vpop.permute.xlu0 %801
      %803 = vrot.lane.b32.xlu0 %v761, 4
      %v804 = vpop.permute.xlu0 %803
      %805 = vrot.lane.b32.xlu0 %v763, 4
      %v806 = vpop.permute.xlu0 %805
      %807 = vrot.lane.b32.xlu0 %v766, 4
      %v808 = vpop.permute.xlu0 %807
      %809 = vrot.lane.b32.xlu0 %v768, 4
      %v810 = vpop.permute.xlu0 %809
      %811 = vrot.lane.b32.xlu0 %v771, 4
      %v812 = vpop.permute.xlu0 %811
      %813 = vrot.lane.b32.xlu0 %v773, 4
      %v814 = vpop.permute.xlu0 %813
      %815 = vrot.lane.b32.xlu0 %v776, 4
      %v816 = vpop.permute.xlu0 %815
      %817 = vrot.lane.b32.xlu0 %v778, 4
      %v818 = vpop.permute.xlu0 %817
      %vm839 = vcmask 1045504
      %v840 = vrot.slane %v668, 2
      %v841 = vrot.slane %v669, 2
      %v842 = vsel %vm839, %v840, %v841
      %v843 = vrot.slane %v670, 2
      %v844 = vsel %vm839, %v841, %v843
      %v845 = vrot.slane %v671, 2
      %v846 = vrot.slane %v672, 2
      %v847 = vsel %vm839, %v845, %v846
      %v848 = vrot.slane %v673, 2
      %v849 = vsel %vm839, %v846, %v848
      %v850 = vrot.slane %v674, 2
      %v851 = vrot.slane %v675, 2
      %v852 = vsel %vm839, %v850, %v851
      %v853 = vrot.slane %v676, 2
      %v854 = vsel %vm839, %v851, %v853
      %v855 = vrot.slane %v677, 2
      %v856 = vrot.slane %v678, 2
      %v857 = vsel %vm839, %v855, %v856
      %v858 = vrot.slane %v679, 2
      %v859 = vsel %vm839, %v856, %v858
      %v860 = vrot.slane %v680, 2
      %v861 = vrot.slane %v681, 2
      %v862 = vsel %vm839, %v860, %v861
      %v863 = vrot.slane %v682, 2
      %v864 = vsel %vm839, %v861, %v863
      %v865 = vrot.slane %v683, 2
      %v866 = vrot.slane %v684, 2
      %v867 = vsel %vm839, %v865, %v866
      %v868 = vrot.slane %v685, 2
      %v869 = vsel %vm839, %v866, %v868
      %v870 = vrot.slane %v686, 2
      %v871 = vrot.slane %v687, 2
      %v872 = vsel %vm839, %v870, %v871
      %v873 = vrot.slane %v688, 2
      %v874 = vsel %vm839, %v871, %v873
      %v875 = vrot.slane %v689, 2
      %v876 = vrot.slane %v690, 2
      %v877 = vsel %vm839, %v875, %v876
      %v878 = vrot.slane %v691, 2
      %v879 = vsel %vm839, %v876, %v878
      %v880 = vrot.slane %v692, 2
      %v881 = vrot.slane %v693, 2
      %v882 = vsel %vm839, %v880, %v881
      %v883 = vrot.slane %v694, 2
      %v884 = vsel %vm839, %v881, %v883
      %v885 = vrot.slane %v695, 2
      %v886 = vrot.slane %v696, 2
      %v887 = vsel %vm839, %v885, %v886
      %v888 = vrot.slane %v697, 2
      %v889 = vsel %vm839, %v886, %v888
      %890 = vrot.lane.b32.xlu0 %v842, 8
      %v891 = vpop.permute.xlu0 %890
      %892 = vrot.lane.b32.xlu0 %v844, 8
      %v893 = vpop.permute.xlu0 %892
      %894 = vrot.lane.b32.xlu0 %v847, 8
      %v895 = vpop.permute.xlu0 %894
      %896 = vrot.lane.b32.xlu0 %v849, 8
      %v897 = vpop.permute.xlu0 %896
      %898 = vrot.lane.b32.xlu0 %v852, 8
      %v899 = vpop.permute.xlu0 %898
      %900 = vrot.lane.b32.xlu0 %v854, 8
      %v901 = vpop.permute.xlu0 %900
      %902 = vrot.lane.b32.xlu0 %v857, 8
      %v903 = vpop.permute.xlu0 %902
      %904 = vrot.lane.b32.xlu0 %v859, 8
      %v905 = vpop.permute.xlu0 %904
      %906 = vrot.lane.b32.xlu0 %v862, 8
      %v907 = vpop.permute.xlu0 %906
      %908 = vrot.lane.b32.xlu0 %v864, 8
      %v909 = vpop.permute.xlu0 %908
      %910 = vrot.lane.b32.xlu0 %v867, 8
      %v911 = vpop.permute.xlu0 %910
      %912 = vrot.lane.b32.xlu0 %v869, 8
      %v913 = vpop.permute.xlu0 %912
      %914 = vrot.lane.b32.xlu0 %v872, 8
      %v915 = vpop.permute.xlu0 %914
      %916 = vrot.lane.b32.xlu0 %v874, 8
      %v917 = vpop.permute.xlu0 %916
      %918 = vrot.lane.b32.xlu0 %v877, 8
      %v919 = vpop.permute.xlu0 %918
      %920 = vrot.lane.b32.xlu0 %v879, 8
      %v921 = vpop.permute.xlu0 %920
      %922 = vrot.lane.b32.xlu0 %v882, 8
      %v923 = vpop.permute.xlu0 %922
      %924 = vrot.lane.b32.xlu0 %v884, 8
      %v925 = vpop.permute.xlu0 %924
      %926 = vrot.lane.b32.xlu0 %v887, 8
      %v927 = vpop.permute.xlu0 %926
      %928 = vrot.lane.b32.xlu0 %v889, 8
      %v929 = vpop.permute.xlu0 %928
      %vm950 = vcmask 31744
      %v951 = vsel %vm950, %v668, %v780
      %v952 = vsel %vm950, %v669, %v782
      %v953 = vsel %vm950, %v671, %v784
      %v954 = vsel %vm950, %v672, %v786
      %v955 = vsel %vm950, %v674, %v788
      %v956 = vsel %vm950, %v675, %v790
      %v957 = vsel %vm950, %v677, %v792
      %v958 = vsel %vm950, %v678, %v794
      %v959 = vsel %vm950, %v680, %v796
      %v960 = vsel %vm950, %v681, %v798
      %v961 = vsel %vm950, %v683, %v800
      %v962 = vsel %vm950, %v684, %v802
      %v963 = vsel %vm950, %v686, %v804
      %v964 = vsel %vm950, %v687, %v806
      %v965 = vsel %vm950, %v689, %v808
      %v966 = vsel %vm950, %v690, %v810
      %v967 = vsel %vm950, %v692, %v812
      %v968 = vsel %vm950, %v693, %v814
      %v969 = vsel %vm950, %v695, %v816
      %v970 = vsel %vm950, %v696, %v818
      %vm971 = vcmask 64512
      %v972 = vsel %vm971, %v951, %v891
      %v973 = vsel %vm971, %v952, %v893
      %v974 = vsel %vm971, %v953, %v895
      %v975 = vsel %vm971, %v954, %v897
      %v976 = vsel %vm971, %v955, %v899
      %v977 = vsel %vm971, %v956, %v901
      %v978 = vsel %vm971, %v957, %v903
      %v979 = vsel %vm971, %v958, %v905
      %v980 = vsel %vm971, %v959, %v907
      %v981 = vsel %vm971, %v960, %v909
      %v982 = vsel %vm971, %v961, %v911
      %v983 = vsel %vm971, %v962, %v913
      %v984 = vsel %vm971, %v963, %v915
      %v985 = vsel %vm971, %v964, %v917
      %v986 = vsel %vm971, %v965, %v919
      %v987 = vsel %vm971, %v966, %v921
      %v988 = vsel %vm971, %v967, %v923
      %v989 = vsel %vm971, %v968, %v925
      %v990 = vsel %vm971, %v969, %v927
      %v991 = vsel %vm971, %v970, %v929
      %1008 = vrot.lane.b32.xlu0 %v974, 12
      %v1009 = vpop.permute.xlu0 %1008
      %1010 = vrot.lane.b32.xlu0 %v975, 12
      %v1011 = vpop.permute.xlu0 %1010
      %1012 = vrot.lane.b32.xlu0 %v976, 12
      %v1013 = vpop.permute.xlu0 %1012
      %1014 = vrot.lane.b32.xlu0 %v977, 12
      %v1015 = vpop.permute.xlu0 %1014
      %1016 = vrot.lane.b32.xlu0 %v978, 12
      %v1017 = vpop.permute.xlu0 %1016
      %1018 = vrot.lane.b32.xlu0 %v979, 12
      %v1019 = vpop.permute.xlu0 %1018
      %1020 = vrot.lane.b32.xlu0 %v980, 12
      %v1021 = vpop.permute.xlu0 %1020
      %1022 = vrot.lane.b32.xlu0 %v981, 12
      %v1023 = vpop.permute.xlu0 %1022
      %1024 = vrot.lane.b32.xlu0 %v982, 12
      %v1025 = vpop.permute.xlu0 %1024
      %1026 = vrot.lane.b32.xlu0 %v983, 12
      %v1027 = vpop.permute.xlu0 %1026
      %1028 = vrot.lane.b32.xlu0 %v984, 12
      %v1029 = vpop.permute.xlu0 %1028
      %1030 = vrot.lane.b32.xlu0 %v985, 12
      %v1031 = vpop.permute.xlu0 %1030
      %1032 = vrot.lane.b32.xlu0 %v986, 12
      %v1033 = vpop.permute.xlu0 %1032
      %1034 = vrot.lane.b32.xlu0 %v987, 12
      %v1035 = vpop.permute.xlu0 %1034
      %1036 = vrot.lane.b32.xlu0 %v988, 12
      %v1037 = vpop.permute.xlu0 %1036
      %1038 = vrot.lane.b32.xlu0 %v989, 12
      %v1039 = vpop.permute.xlu0 %1038
      %1058 = vrot.lane.b32.xlu0 %v976, 24
      %v1059 = vpop.permute.xlu0 %1058
      %1060 = vrot.lane.b32.xlu0 %v977, 24
      %v1061 = vpop.permute.xlu0 %1060
      %1062 = vrot.lane.b32.xlu0 %v978, 24
      %v1063 = vpop.permute.xlu0 %1062
      %1064 = vrot.lane.b32.xlu0 %v979, 24
      %v1065 = vpop.permute.xlu0 %1064
      %1066 = vrot.lane.b32.xlu0 %v980, 24
      %v1067 = vpop.permute.xlu0 %1066
      %1068 = vrot.lane.b32.xlu0 %v981, 24
      %v1069 = vpop.permute.xlu0 %1068
      %1070 = vrot.lane.b32.xlu0 %v982, 24
      %v1071 = vpop.permute.xlu0 %1070
      %1072 = vrot.lane.b32.xlu0 %v983, 24
      %v1073 = vpop.permute.xlu0 %1072
      %1074 = vrot.lane.b32.xlu0 %v984, 24
      %v1075 = vpop.permute.xlu0 %1074
      %1076 = vrot.lane.b32.xlu0 %v985, 24
      %v1077 = vpop.permute.xlu0 %1076
      %1078 = vrot.lane.b32.xlu0 %v986, 24
      %v1079 = vpop.permute.xlu0 %1078
      %1080 = vrot.lane.b32.xlu0 %v987, 24
      %v1081 = vpop.permute.xlu0 %1080
      %1082 = vrot.lane.b32.xlu0 %v988, 24
      %v1083 = vpop.permute.xlu0 %1082
      %1084 = vrot.lane.b32.xlu0 %v989, 24
      %v1085 = vpop.permute.xlu0 %1084
      %1086 = vrot.lane.b32.xlu0 %v990, 24
      %v1087 = vpop.permute.xlu0 %1086
      %1088 = vrot.lane.b32.xlu0 %v991, 24
      %v1089 = vpop.permute.xlu0 %1088
      %vm1106 = vcmask 97280
      %v1107 = vsel %vm1106, %v972, %v1009
      %v1108 = vsel %vm1106, %v973, %v1011
      %v1109 = vsel %vm1106, %v974, %v1013
      %v1110 = vsel %vm1106, %v975, %v1015
      %v1111 = vsel %vm1106, %v976, %v1017
      %v1112 = vsel %vm1106, %v977, %v1019
      %v1113 = vsel %vm1106, %v978, %v1021
      %v1114 = vsel %vm1106, %v979, %v1023
      %v1115 = vsel %vm1106, %v980, %v1025
      %v1116 = vsel %vm1106, %v981, %v1027
      %v1117 = vsel %vm1106, %v982, %v1029
      %v1118 = vsel %vm1106, %v983, %v1031
      %v1119 = vsel %vm1106, %v984, %v1033
      %v1120 = vsel %vm1106, %v985, %v1035
      %v1121 = vsel %vm1106, %v986, %v1037
      %v1122 = vsel %vm1106, %v987, %v1039
      %vm1123 = vcmask 195584
      %v1124 = vsel %vm1123, %v1107, %v1059
      %v1125 = vsel %vm1123, %v1108, %v1061
      %v1126 = vsel %vm1123, %v1109, %v1063
      %v1127 = vsel %vm1123, %v1110, %v1065
      %v1128 = vsel %vm1123, %v1111, %v1067
      %v1129 = vsel %vm1123, %v1112, %v1069
      %v1130 = vsel %vm1123, %v1113, %v1071
      %v1131 = vsel %vm1123, %v1114, %v1073
      %v1132 = vsel %vm1123, %v1115, %v1075
      %v1133 = vsel %vm1123, %v1116, %v1077
      %v1134 = vsel %vm1123, %v1117, %v1079
      %v1135 = vsel %vm1123, %v1118, %v1081
      %v1136 = vsel %vm1123, %v1119, %v1083
      %v1137 = vsel %vm1123, %v1120, %v1085
      %v1138 = vsel %vm1123, %v1121, %v1087
      %v1139 = vsel %vm1123, %v1122, %v1089
      %v1140 = vld [vmem:[%s4] sm:$0xff]
      %v1141 = vld [vmem:[%s4 + $0x8] sm:$0xff]
      %v1142 = vld [vmem:[%s4 + $0x10] sm:$0xff]
      %v1143 = vld [vmem:[%s4 + $0x18] sm:$0xff]
      %v1144 = vld [vmem:[%s4 + $0x20] sm:$0xf]
      %v1145 = vld [vmem:[%s5] sm:$0x1]
      %v1147 = vperm.slane %v1145, 0
      %vm1149 = vcmask 293888
      %v1151 = vsel %vm1149, %v1124, 0
      %v1154 = vsel %vm1149, %v1125, 0
      %v1157 = vsel %vm1149, %v1126, 0
      %v1160 = vsel %vm1149, %v1127, 0
      %v1163 = vsel %vm1149, %v1128, 0
      %v1166 = vsel %vm1149, %v1129, 0
      %v1169 = vsel %vm1149, %v1130, 0
      %v1172 = vsel %vm1149, %v1131, 0
      %v1175 = vsel %vm1149, %v1132, 0
      %v1178 = vsel %vm1149, %v1133, 0
      %v1181 = vsel %vm1149, %v1134, 0
      %v1184 = vsel %vm1149, %v1135, 0
      %v1187 = vsel %vm1149, %v1136, 0
      %v1190 = vsel %vm1149, %v1137, 0
      %v1193 = vsel %vm1149, %v1138, 0
      %v1196 = vsel %vm1149, %v1139, 0
      %vm1198 = vcmask 1043456
      %v1200 = vsel %vm1198, %v1144, 0
      %1202 = vmatpush.msra.mxu0 0.0
      %1203 = vmatpush.msra.mxu0 0.0
      %1204 = vmatpush.msra.mxu0 0.0
      %1205 = vmatpush.msra.mxu0 0.0
      %1206 = vmatpush.msra.mxu0 0.0
      %1207 = vmatpush.msra.mxu0 0.0
      %1208 = vmatpush.msra.mxu0 0.0
      %1209 = vmatpush.msra.mxu0 0.0
      %1210 = vmatpush.msra.mxu0 0.0
      %1211 = vmatpush.msra.mxu0 0.0
      %1212 = vmatpush.msra.mxu0 0.0
      %1213 = vmatpush.msra.mxu0 %v1200
      %1214 = vmatpush.msra.mxu0 %v1143
      %1215 = vmatpush.msra.mxu0 %v1142
      %1216 = vmatpush.msra.mxu0 %v1141
      %1217 = vmatpush.msra.mxu0 %v1140
      %1218 = vmatmul.f32.gmra.mxu0 %v1151
      %v1219 = vpop.f32.mrf.mxu0
      %v1220 = vadd.f32 %v1147, %v1219
      %1221 = vmatmul.f32.gmra.mxu0 %v1154
      %v1222 = vpop.f32.mrf.mxu0
      %v1223 = vadd.f32 %v1147, %v1222
      %1224 = vmatmul.f32.gmra.mxu0 %v1157
      %v1225 = vpop.f32.mrf.mxu0
      %v1226 = vadd.f32 %v1147, %v1225
      %1227 = vmatmul.f32.gmra.mxu0 %v1160
      %v1228 = vpop.f32.mrf.mxu0
      %v1229 = vadd.f32 %v1147, %v1228
      %1230 = vmatmul.f32.gmra.mxu0 %v1163
      %v1231 = vpop.f32.mrf.mxu0
      %v1232 = vadd.f32 %v1147, %v1231
      %1233 = vmatmul.f32.gmra.mxu0 %v1166
      %v1234 = vpop.f32.mrf.mxu0
      %v1235 = vadd.f32 %v1147, %v1234
      %1236 = vmatmul.f32.gmra.mxu0 %v1169
      %v1237 = vpop.f32.mrf.mxu0
      %v1238 = vadd.f32 %v1147, %v1237
      %1239 = vmatmul.f32.gmra.mxu0 %v1172
      %v1240 = vpop.f32.mrf.mxu0
      %v1241 = vadd.f32 %v1147, %v1240
      %1242 = vmatmul.f32.gmra.mxu0 %v1175
      %v1243 = vpop.f32.mrf.mxu0
      %v1244 = vadd.f32 %v1147, %v1243
      %1245 = vmatmul.f32.gmra.mxu0 %v1178
      %v1246 = vpop.f32.mrf.mxu0
      %v1247 = vadd.f32 %v1147, %v1246
      %1248 = vmatmul.f32.gmra.mxu0 %v1181
      %v1249 = vpop.f32.mrf.mxu0
      %v1250 = vadd.f32 %v1147, %v1249
      %1251 = vmatmul.f32.gmra.mxu0 %v1184
      %v1252 = vpop.f32.mrf.mxu0
      %v1253 = vadd.f32 %v1147, %v1252
      %1254 = vmatmul.f32.gmra.mxu0 %v1187
      %v1255 = vpop.f32.mrf.mxu0
      %v1256 = vadd.f32 %v1147, %v1255
      %1257 = vmatmul.f32.gmra.mxu0 %v1190
      %v1258 = vpop.f32.mrf.mxu0
      %v1259 = vadd.f32 %v1147, %v1258
      %1260 = vmatmul.f32.gmra.mxu0 %v1193
      %v1261 = vpop.f32.mrf.mxu0
      %v1262 = vadd.f32 %v1147, %v1261
      %1263 = vmatmul.f32.gmra.mxu0 %v1196
      %v1264 = vpop.f32.mrf.mxu0
      %v1265 = vadd.f32 %v1147, %v1264
      %1266 = vdwg.mxu0
      %1267 = vxpose.xlu0.b32.start [1/16] %v1220, 128
      %1268 = vxpose.xlu0.b32.cont [2/16] %v1223, 128
      %1269 = vxpose.xlu0.b32.cont [3/16] %v1226, 128
      %1270 = vxpose.xlu0.b32.cont [4/16] %v1229, 128
      %1271 = vxpose.xlu0.b32.cont [5/16] %v1232, 128
      %1272 = vxpose.xlu0.b32.cont [6/16] %v1235, 128
      %1273 = vxpose.xlu0.b32.cont [7/16] %v1238, 128
      %1274 = vxpose.xlu0.b32.cont [8/16] %v1241, 128
      %1275 = vxpose.xlu0.b32.cont [9/16] %v1244, 128
      %1276 = vxpose.xlu0.b32.cont [10/16] %v1247, 128
      %1277 = vxpose.xlu0.b32.cont [11/16] %v1250, 128
      %1278 = vxpose.xlu0.b32.cont [12/16] %v1253, 128
      %1279 = vxpose.xlu0.b32.cont [13/16] %v1256, 128
      %1280 = vxpose.xlu0.b32.cont [14/16] %v1259, 128
      %1281 = vxpose.xlu0.b32.cont [15/16] %v1262, 128
      %1282 = vxpose.xlu0.b32.end [16/16] %v1265, 128
      %v1283 = vpop.trf.xlu0
      %v1284 = vpop.trf.xlu0
      %v1285 = vpop.trf.xlu0
      %v1286 = vpop.trf.xlu0
      %v1287 = vpop.trf.xlu0
      %v1288 = vpop.trf.xlu0
      %v1289 = vpop.trf.xlu0
      %v1290 = vpop.trf.xlu0
      %v1291 = vpop.trf.xlu0
      %v1292 = vpop.trf.xlu0
      %v1293 = vpop.trf.xlu0
      %v1294 = vpop.trf.xlu0
      %v1295 = vpop.trf.xlu0
      %v1296 = vpop.trf.xlu0
      %v1297 = vpop.trf.xlu0
      %v1298 = vpop.trf.xlu0
      %1299 = vst [vmem:[%s368] sm:$0xff] %v1283
      %p1300 = scmp.lt.s32.totalorder %s21, 1
      %s1301 = scalar_select %p1300, %s21, 1
      %p1302 = scmp.lt.s32.totalorder %s22, 1
      %s1303 = scalar_select %p1302, %s22, 1
      %s1304 = smul.addr %s1301, 2
      %s1305 = sadd.s32 %s1303, %s1304
      %s1306 = smul.addr %s1305, 8
      %s1307 = scalar_lea.vmem %s6, %s1306
      // Predicated region
      $region45: #{convolutional_block_forward.1} parent=43 // pred_check
        %p1308 = pneg %p193
      $region46: #{convolutional_block_forward.1} parent=43 // pred_check_branch
        %1310 = sbr.rel (%p1308) target = $region48
      $region47: #{convolutional_block_forward.1} parent=43 // pred_region
        _
      $region48: #{convolutional_block_forward.1} parent=43 // pred_fallthru
        _
    $region44: #{convolutional_block_forward.1} parent=5 // pred_fallthru
      _
    %p1311 = scmp.le.s32.totalorder 2, %s12
    // Predicated region
    $region49: #{convolutional_block_forward.1} parent=5 // pred_check
      %p1312 = pneg %p1311
    $region50: #{convolutional_block_forward.1} parent=5 // pred_check_branch
      %1314 = sbr.rel (%p1312) target = $region52
    $region51: #{convolutional_block_forward.1} parent=5 // pred_region
      %s1315 = ssub.s32 %s12, 2
      // Predicated region
      $region53: #{convolutional_block_forward.1} parent=51 // pred_check
        %p1316 = pneg %p199
      $region54: #{convolutional_block_forward.1} parent=51 // pred_check_branch
        %1318 = sbr.rel (%p1316) target = $region56
      $region55: #{convolutional_block_forward.1} parent=51 // pred_region
        %p1319 = scmp.lt.s32.totalorder %s23, 1
        %s1320 = scalar_select %p1319, %s23, 1
        %p1321 = scmp.lt.s32.totalorder %s24, 1
        %s1322 = scalar_select %p1321, %s24, 1
        %s1323 = smul.addr %s1320, 2
        %s1324 = sadd.s32 %s1322, %s1323
        %s1325 = smul.addr %s1324, 8
        %s1326 = scalar_lea.vmem %s6, %s1325
      $region56: #{convolutional_block_forward.1} parent=51 // pred_fallthru
        _
    $region52: #{convolutional_block_forward.1} parent=5 // pred_fallthru
      _
  $region6: #{convolutional_block_forward.1} parent=0 // loop_footer
    %s16 = sadd.s32 1, %s12
  $region7: #{convolutional_block_forward.1} parent=0 // loop_footer_branch
    %11 = sbr.rel target = $region3
  $region8: #{convolutional_block_forward.1} parent=0 // loop_exit
    _

</llo_original>
